<compile_context>
chip_gen: v7x
topology: tpu7x:2x2x1
jax: 0.10.0
libtpu: 0.0.40
codegen_flags: <defaults>
</compile_context>

<pallas_src>
import math

import jax
import jax.numpy as jnp
from jax.experimental import pallas as pl
from jax.experimental.pallas import tpu as pltpu


# ---------------------------------------------------------------------------
# Tiling helpers
# ---------------------------------------------------------------------------
def _round_up(x, m):
    return ((x + m - 1) // m) * m


def _choose_tile(dim, cap, multiple):
    """Return (tile, padded_dim).

    * dim <= cap           -> single full-dim block (always legal, no padding).
    * dim  > cap, divisor  -> largest tile <= cap, multiple of `multiple`,
                              dividing dim exactly.
    * dim  > cap, no divisor -> cap-aligned tile, dim padded up to a multiple
                              of it (blocks stay bounded; never a huge
                              full-dimension fallback that could blow VMEM).
    """
    if dim <= cap:
        return dim, dim
    t = (cap // multiple) * multiple
    while t >= multiple:
        if dim % t == 0:
            return t, dim
        t -= multiple
    t = (cap // multiple) * multiple
    return t, _round_up(dim, t)


def _hw_config():
    """Generation-specific tiling / VMEM / buffering knobs."""
    kind = ""
    try:
        kind = (jax.devices()[0].device_kind or "").lower()
    except Exception:
        pass
    if "v7" in kind:
        # v7x: 64 MiB physical VMEM, ~3.2 TB/s HBM, 2 TC/chip -> big tiles,
        # deeper weight buffering, scoped limit kept <= ~48 MiB.
        return {"tile_cap": 1024, "vmem_limit": 48 * 1024 * 1024, "w_buffers": 3}
    # v5e / v6e: 128 MiB physical VMEM -> raise the scoped limit well above the
    # conservative 16/32 MiB defaults so 1024-wide tiles stay double-buffered.
    return {"tile_cap": 1024, "vmem_limit": 64 * 1024 * 1024, "w_buffers": 2}


# ---------------------------------------------------------------------------
# Parameter preparation (hoisted out of the forward hot path)
# ---------------------------------------------------------------------------
def prepare_parallel_linear_params(weight, bias, weight_stream_dtype=None):
    """Precompute kernel-friendly weight/bias layouts ONCE.

    weight: (J, L, K), bias: (J, L).
    weight_stream_dtype: optional narrower storage dtype (e.g. jnp.bfloat16)
    for the streamed weights; the kernels always accumulate in f32.
    # TODO(synk): on v5e/v6e int8 and on v7x fp8(e4m3) would quarter the weight
    # stream; not implemented here to keep the script self-contained.
    """
    J, L, K = weight.shape
    wdt = weight.dtype if weight_stream_dtype is None else weight_stream_dtype
    # 2-D path: x (B,K) @ w2 (K, J*L) with w2[k, j*L + l] == weight[j, l, k]
    w_2d = jnp.transpose(weight, (2, 0, 1)).reshape(K, J * L).astype(wdt)
    # 3-D path: per-layer (B,K) @ (K,L)
    w_3d = jnp.transpose(weight, (0, 2, 1)).astype(wdt)
    return {
        "n_layers": J,
        "out_features": L,
        "in_features": K,
        "w_2d": w_2d,
        "b_2d": bias.reshape(1, J * L).astype(jnp.float32),
        "w_3d": w_3d,
        "b_3d": bias.reshape(J, 1, L).astype(jnp.float32),
    }


# ---------------------------------------------------------------------------
# 2-D input path: fused matmul  x (B, K) @ W' (K, J*L)
# ---------------------------------------------------------------------------
def _make_fused_2d_kernel(tk, x_pinned):
    def kernel(x_ref, w_ref, b_ref, o_ref, acc_ref):
        # x: (tb, K) if pinned else (tb, tk); w: (tk, tn); b: (1, tn); o/acc: (tb, tn)
        k = pl.program_id(2)

        @pl.when(k == 0)
        def _init():
            acc_ref[...] = jnp.zeros_like(acc_ref)

        if x_pinned:
            # x row-panel stays VMEM-resident across the n/k loops (its block
            # index only changes with b); slice the k-chunk in-kernel.
            x_blk = x_ref[:, pl.ds(pl.multiple_of(k * tk, tk), tk)]
        else:
            x_blk = x_ref[...]

        acc_ref[...] += jnp.dot(x_blk, w_ref[...],
                                preferred_element_type=jnp.float32)

        @pl.when(k == pl.num_programs(2) - 1)
        def _finalize():
            o_ref[...] = (acc_ref[...] + b_ref[...]).astype(o_ref.dtype)

    return kernel


def _forward_2d(params, x, hw):
    J, L, K = params["n_layers"], params["out_features"], params["in_features"]
    B = x.shape[0]
    N = J * L
    w2, b2 = params["w_2d"], params["b_2d"]

    cap = hw["tile_cap"]
    tb, B_pad = _choose_tile(B, 512, 8)      # parallel batch axis bounds VMEM
    tn, N_pad = _choose_tile(N, cap, 128)    # lane-dense fused output axis
    tk, K_pad = _choose_tile(K, cap, 128)    # reduction axis

    # Try to expose >=2 parallel blocks so the v7x megacore can shard.
    if (B_pad // tb) * (N_pad // tn) < 2:
        if tn % 256 == 0:
            tn //= 2
        elif tb % 16 == 0:
            tb //= 2

    # Padding only triggers for awkward dims larger than the tile cap.
    if B_pad != B:
        x = jnp.pad(x, ((0, B_pad - B), (0, 0)))
    if K_pad != K:
        x = jnp.pad(x, ((0, 0), (0, K_pad - K)))
        w2 = jnp.pad(w2, ((0, K_pad - K), (0, 0)))
    if N_pad != N:
        w2 = jnp.pad(w2, ((0, 0), (0, N_pad - N)))
        b2 = jnp.pad(b2, ((0, 0), (0, N_pad - N)))

    # Pin x in VMEM when its (tb, K) row-panel is small and there are multiple
    # k steps (otherwise the (b, k) index map already avoids re-fetches).
    x_pinned = (K_pad // tk > 1) and (tb * K_pad * x.dtype.itemsize <= 4 * 1024 * 1024)
    if x_pinned:
        x_spec = pl.BlockSpec((tb, K_pad), lambda b, n, k: (b, 0))
    else:
        x_spec = pl.BlockSpec((tb, tk), lambda b, n, k: (b, k))

    w_kwargs = {}
    if hw["w_buffers"] > 2:
        w_kwargs["pipeline_mode"] = pl.Buffered(hw["w_buffers"])
    w_spec = pl.BlockSpec((tk, tn), lambda b, n, k: (k, n), **w_kwargs)

    out = pl.pallas_call(
        _make_fused_2d_kernel(tk, x_pinned),
        out_shape=jax.ShapeDtypeStruct((B_pad, N_pad), x.dtype),
        grid=(B_pad // tb, N_pad // tn, K_pad // tk),
        in_specs=[x_spec, w_spec,
                  pl.BlockSpec((1, tn), lambda b, n, k: (0, n))],
        out_specs=pl.BlockSpec((tb, tn), lambda b, n, k: (b, n)),
        scratch_shapes=[pltpu.VMEM((tb, tn), jnp.float32)],
        compiler_params=pltpu.CompilerParams(
            dimension_semantics=("parallel", "parallel", "arbitrary"),
            vmem_limit_bytes=hw["vmem_limit"],
        ),
    )(x, w2, b2)

    if B_pad != B or N_pad != N:
        out = out[:B, :N]
    # Contiguous reshape (free): (B, J*L) -> (B, J, L).
    return out.reshape(B, J, L)


# ---------------------------------------------------------------------------
# 3-D input path: jb layers per step, standard (K, L) weight layout
# ---------------------------------------------------------------------------
def _layered_3d_kernel(x_ref, w_ref, b_ref, o_ref, acc_ref):
    # x: (jb, tb, tk), w: (jb, tk, tl), b: (jb, 1, tl), o/acc: (jb, tb, tl)
    k = pl.program_id(3)

    @pl.when(k == 0)
    def _init():
        acc_ref[...] = jnp.zeros_like(acc_ref)

    # Batch (layer) dim leading on both operands -> natural dot_general layout,
    # no in-kernel relayouts in the hot loop.
    acc_ref[...] += jnp.einsum("jbk,jkl->jbl", x_ref[...], w_ref[...],
                               preferred_element_type=jnp.float32)

    @pl.when(k == pl.num_programs(3) - 1)
    def _finalize():
        o_ref[...] = (acc_ref[...] + b_ref[...]).astype(o_ref.dtype)


def _forward_3d(params, x, hw, out_layout="bjl"):
    J, L, K = params["n_layers"], params["out_features"], params["in_features"]
    B = x.shape[0]
    assert x.shape[1] == J and x.shape[2] == K
    w3, b3 = params["w_3d"], params["b_3d"]

    cap = hw["tile_cap"]
    tb, B_pad = _choose_tile(B, 256, 8)
    tl, L_pad = _choose_tile(L, cap, 128)    # prefers full L -> contiguous weight rows
    tk, K_pad = _choose_tile(K, cap, 128)

    # Layers per grid step: amortize per-step overhead when per-layer blocks are
    # small, but stay within a per-step VMEM budget and keep >=2 parallel J
    # blocks for the v7x megacore.
    itemsize = w3.dtype.itemsize
    per_layer_bytes = tk * tl * itemsize + (tb * tk + 2 * tb * tl) * 4
    jb_cap = max(1, (4 * 1024 * 1024) // max(1, per_layer_bytes))
    if J >= 2:
        jb_cap = min(jb_cap, max(1, J // 2))
    jb = 1
    for d in range(min(J, jb_cap), 0, -1):
        if J % d == 0:
            jb = d
            break

    # Activation relayout (B,J,K)->(J,B,K); small next to the weight stream.
    # TODO(synk): accept x already in (J,B,K) to skip this pass for large B.
    x_t = jnp.transpose(x, (1, 0, 2))

    if B_pad != B:
        x_t = jnp.pad(x_t, ((0, 0), (0, B_pad - B), (0, 0)))
    if K_pad != K:
        x_t = jnp.pad(x_t, ((0, 0), (0, 0), (0, K_pad - K)))
        w3 = jnp.pad(w3, ((0, 0), (0, K_pad - K), (0, 0)))
    if L_pad != L:
        w3 = jnp.pad(w3, ((0, 0), (0, 0), (0, L_pad - L)))
        b3 = jnp.pad(b3, ((0, 0), (0, 0), (0, L_pad - L)))

    w_kwargs = {}
    if hw["w_buffers"] > 2:
        w_kwargs["pipeline_mode"] = pl.Buffered(hw["w_buffers"])

    out_jbl = pl.pallas_call(
        _layered_3d_kernel,
        out_shape=jax.ShapeDtypeStruct((J, B_pad, L_pad), x.dtype),
        grid=(B_pad // tb, J // jb, L_pad // tl, K_pad // tk),
        in_specs=[
            pl.BlockSpec((jb, tb, tk), lambda b, j, l, k: (j, b, k)),
            pl.BlockSpec((jb, tk, tl), lambda b, j, l, k: (j, k, l), **w_kwargs),
            pl.BlockSpec((jb, 1, tl), lambda b, j, l, k: (j, 0, l)),
        ],
        out_specs=pl.BlockSpec((jb, tb, tl), lambda b, j, l, k: (j, b, l)),
        scratch_shapes=[pltpu.VMEM((jb, tb, tl), jnp.float32)],
        compiler_params=pltpu.CompilerParams(
            dimension_semantics=("parallel", "parallel", "parallel", "arbitrary"),
            vmem_limit_bytes=hw["vmem_limit"],
        ),
    )(x_t, w3, b3)

    if B_pad != B or L_pad != L:
        out_jbl = out_jbl[:, :B, :L]
    if out_layout == "jbl":
        # Layer-major layout straight from the kernel; consumers that can take
        # this skip a full HBM read+write pass over the output.
        return out_jbl
    # TODO(synk): default matches PyTorch (B, J, L); downstream consumers should
    # prefer out_layout="jbl" to avoid this extra HBM pass.
    return jnp.transpose(out_jbl, (1, 0, 2))


# ---------------------------------------------------------------------------
# Public API
# ---------------------------------------------------------------------------
def parallel_linear_apply(params, x, out_layout="bjl"):
    hw = _hw_config()
    if x.ndim == 2:
        return _forward_2d(params, x, hw)
    if x.ndim == 3:
        return _forward_3d(params, x, hw, out_layout)
    raise ValueError("input must be 2-D or 3-D")


def parallel_linear(x, weight, bias):
    """Convenience wrapper matching PyTorch forward(input).  For repeated calls
    prepare params once with prepare_parallel_linear_params and reuse them."""
    return parallel_linear_apply(prepare_parallel_linear_params(weight, bias), x)


# ---------------------------------------------------------------------------
# Deterministic init mirroring nn.init.kaiming_uniform_(a=sqrt(5)) + bias uniform
# ---------------------------------------------------------------------------
def _init_params(key, n_layers, in_features, out_features):
    kw, kb = jax.random.split(key)
    # PyTorch fan_in for a 3-D (n_layers, out, in) tensor = size(1) * prod(sizes[2:])
    fan_in = out_features * in_features
    gain = math.sqrt(2.0 / (1.0 + 5.0))             # a = sqrt(5)
    bound_w = math.sqrt(3.0) * gain / math.sqrt(fan_in)
    weight = jax.random.uniform(
        kw, (n_layers, out_features, in_features), jnp.float32, -bound_w, bound_w
    )
    bound_b = 1.0 / math.sqrt(fan_in)
    bias = jax.random.uniform(
        kb, (n_layers, out_features), jnp.float32, -bound_b, bound_b
    )
    return weight, bias


if __name__ == "__main__":
    key = jax.random.PRNGKey(0)
    k_param, k_x2, k_x3 = jax.random.split(key, 3)

    n_layers, in_features, out_features = 3, 32, 16
    batch = 4

    weight, bias = _init_params(k_param, n_layers, in_features, out_features)

    # Weight relayouts hoisted out of the forward (done once here).
    params = prepare_parallel_linear_params(weight, bias)

    # 2-D input path: x (B, K) -> out (B, J, L)
    x2 = jax.random.normal(k_x2, (batch, in_features), jnp.float32)
    out2 = jax.block_until_ready(parallel_linear_apply(params, x2))
    ref2 = jnp.einsum("ik,jlk->ijl", x2, weight) + bias[None, :, :]
    assert out2.shape == (batch, n_layers, out_features)
    assert jnp.allclose(out2, ref2, atol=1e-5, rtol=1e-5)

    # 3-D input path: x (B, J, K) -> out (B, J, L)
    x3 = jax.random.normal(k_x3, (batch, n_layers, in_features), jnp.float32)
    out3 = jax.block_until_ready(parallel_linear_apply(params, x3))
    ref3 = jnp.einsum("ijk,jlk->ijl", x3, weight) + bias[None, :, :]
    assert out3.shape == (batch, n_layers, out_features)
    assert jnp.allclose(out3, ref3, atol=1e-5, rtol=1e-5)

    # Layer-major output layout (skips the trailing HBM transpose for consumers
    # that accept (J, B, L)).
    out3_jbl = jax.block_until_ready(parallel_linear_apply(params, x3, out_layout="jbl"))
    assert out3_jbl.shape == (n_layers, batch, out_features)
    assert jnp.allclose(jnp.transpose(out3_jbl, (1, 0, 2)), ref3, atol=1e-5, rtol=1e-5)

    # bf16 weight streaming (halves the dominant HBM stream), f32 accumulation.
    params_bf16 = prepare_parallel_linear_params(
        weight, bias, weight_stream_dtype=jnp.bfloat16)
    out2_b = jax.block_until_ready(parallel_linear_apply(params_bf16, x2))
    out3_b = jax.block_until_ready(parallel_linear_apply(params_bf16, x3))
    assert jnp.allclose(out2_b, ref2, atol=2e-2, rtol=2e-2)
    assert jnp.allclose(out3_b, ref3, atol=2e-2, rtol=2e-2)

    print("KERNEL_OK")
</pallas_src>

<mosaic_0001>
module attributes {stable_mosaic.version = 11 : i64} {
  func.func @kernel(%arg0: i32, %arg1: i32, %arg2: i32, %arg3: memref<4x32xf32, #tpu.memory_space<vmem>>, %arg4: memref<32x48xf32, #tpu.memory_space<vmem>>, %arg5: memref<1x48xf32, #tpu.memory_space<vmem>>, %arg6: memref<4x48xf32, #tpu.memory_space<vmem>>, %arg7: memref<4x48xf32, #tpu.memory_space<vmem>>) attributes {dimension_semantics = [#tpu.dimension_semantics<parallel>, #tpu.dimension_semantics<parallel>, #tpu.dimension_semantics<arbitrary>], iteration_bounds = array<i64: 1, 1, 1>, scalar_prefetch = 0 : i64, scratch_operands = 1 : i64, tpu.core_type = #tpu.core_type<tc>, window_params = [{transform_indices = @transform_0, window_bounds = array<i64: 4, 32>}, {transform_indices = @transform_1, window_bounds = array<i64: 32, 48>}, {transform_indices = @transform_2, window_bounds = array<i64: 1, 48>}, {transform_indices = @transform_3, window_bounds = array<i64: 4, 48>}]} {
    %c0_i32 = arith.constant 0 : i32
    %0 = arith.cmpi eq, %arg2, %c0_i32 : i32
    %1 = arith.extui %0 : i1 to i32
    %c0_i32_0 = arith.constant 0 : i32
    %2 = arith.cmpi ne, %1, %c0_i32_0 : i32
    scf.if %2 {
      %cst_10 = arith.constant 0.000000e+00 : f32
      %12 = vector.broadcast %cst_10 : f32 to vector<4x48xf32>
      %c0_11 = arith.constant 0 : index
      %c0_12 = arith.constant 0 : index
      %13 = vector.load %arg7[%c0_11, %c0_12] : memref<4x48xf32, #tpu.memory_space<vmem>>, vector<4x48xf32>
      tpu.vector_store %arg7[%c0_11, %c0_12], %12 {strides = array<i32>} : memref<4x48xf32, #tpu.memory_space<vmem>>, vector<4x48xf32>,
    } else {
    }
    %c0 = arith.constant 0 : index
    %c0_1 = arith.constant 0 : index
    %3 = vector.load %arg3[%c0, %c0_1] : memref<4x32xf32, #tpu.memory_space<vmem>>, vector<4x32xf32>
    %c0_2 = arith.constant 0 : index
    %c0_3 = arith.constant 0 : index
    %4 = vector.load %arg7[%c0_2, %c0_3] : memref<4x48xf32, #tpu.memory_space<vmem>>, vector<4x48xf32>
    %c0_4 = arith.constant 0 : index
    %c0_5 = arith.constant 0 : index
    %5 = vector.load %arg4[%c0_4, %c0_5] : memref<32x48xf32, #tpu.memory_space<vmem>>, vector<32x48xf32>
    %cst = arith.constant dense<0.000000e+00> : vector<4x48xf32>
    %6 = tpu.matmul %3, %5, %cst {dimension_numbers = #tpu.dot_dimension_numbers<[1], [0], [0], [1], [0, 0, 1, 1], [], []>} : vector<4x32xf32>, vector<32x48xf32>, vector<4x48xf32> -> vector<4x48xf32>
    %7 = arith.addf %4, %6 : vector<4x48xf32>
    %c0_6 = arith.constant 0 : index
    %c0_7 = arith.constant 0 : index
    %8 = vector.load %arg7[%c0_6, %c0_7] : memref<4x48xf32, #tpu.memory_space<vmem>>, vector<4x48xf32>
    tpu.vector_store %arg7[%c0_6, %c0_7], %7 {strides = array<i32>} : memref<4x48xf32, #tpu.memory_space<vmem>>, vector<4x48xf32>,
    %c0_i32_8 = arith.constant 0 : i32
    %9 = arith.cmpi eq, %arg2, %c0_i32_8 : i32
    %10 = arith.extui %9 : i1 to i32
    %c0_i32_9 = arith.constant 0 : i32
    %11 = arith.cmpi ne, %10, %c0_i32_9 : i32
    scf.if %11 {
      %c0_10 = arith.constant 0 : index
      %c0_11 = arith.constant 0 : index
      %12 = vector.load %arg7[%c0_10, %c0_11] : memref<4x48xf32, #tpu.memory_space<vmem>>, vector<4x48xf32>
      %c0_12 = arith.constant 0 : index
      %c0_13 = arith.constant 0 : index
      %13 = vector.load %arg5[%c0_12, %c0_13] : memref<1x48xf32, #tpu.memory_space<vmem>>, vector<1x48xf32>
      %14 = vector.broadcast %13 : vector<1x48xf32> to vector<4x48xf32>
      %15 = arith.addf %12, %14 : vector<4x48xf32>
      %c0_14 = arith.constant 0 : index
      %c0_15 = arith.constant 0 : index
      %16 = vector.load %arg6[%c0_14, %c0_15] : memref<4x48xf32, #tpu.memory_space<vmem>>, vector<4x48xf32>
      tpu.vector_store %arg6[%c0_14, %c0_15], %15 {strides = array<i32>} : memref<4x48xf32, #tpu.memory_space<vmem>>, vector<4x48xf32>,
    } else {
    }
    return
  }
  func.func @transform_0(%arg0: i32, %arg1: i32, %arg2: i32) -> (i32, i32) {
    %c0_i32 = arith.constant 0 : i32
    return %arg0, %arg2 : i32, i32
  }
  func.func @transform_1(%arg0: i32, %arg1: i32, %arg2: i32) -> (i32, i32) {
    %c0_i32 = arith.constant 0 : i32
    return %arg2, %arg1 : i32, i32
  }
  func.func @transform_2(%arg0: i32, %arg1: i32, %arg2: i32) -> (i32, i32) {
    %c0_i32 = arith.constant 0 : i32
    %c0_i32_0 = arith.constant 0 : i32
    return %c0_i32, %arg1 : i32, i32
  }
  func.func @transform_3(%arg0: i32, %arg1: i32, %arg2: i32) -> (i32, i32) {
    %c0_i32 = arith.constant 0 : i32
    return %arg0, %arg1 : i32, i32
  }
}

</mosaic_0001>

<llo_original>
// kernel: tpu_custom_call.1
$region0: #{tpu_custom_call.1}
  #allocation0 [shape = 'u32[]', space=smem, size = 0x4, offset = 0x4, fixed_abs, tag = 'smem constant byte address 0x4 - core index']
  #allocation1 [shape = 'u32[144,128]{1,0:T(1,128)}', space=vmem, size = 0x12000, scoped, tag = 'internal scratch']
  #allocation2 [shape = 'f32[4,48]{1,0:T(4,128)}', space=vmem, size = 0x800, scoped, tag = 'scratch operand']
  %s0 = inlined_call_operand.hbm [shape: f32[4,32], index: 0, kind: input, shape index: {}]
  %s1 = inlined_call_operand.hbm [shape: f32[32,48], index: 1, kind: input, shape index: {}]
  %s2 = inlined_call_operand.hbm [shape: f32[1,48], index: 2, kind: input, shape index: {}]
  %s3 = inlined_call_operand.hbm [shape: f32[4,48], index: 3, kind: output, shape index: {}]
  %s4 = sld [smem:[#allocation0]]
  $region42: #{tpu_custom_call.1} parent=0
    _
  %s6 = ssub.s32 1, %s4
  %s7 = scalar_select 0, %s6, %s4
  $region1: #{tpu_custom_call.1} parent=0
    #allocation3 [shape = 'u8[2048]{0}', space=vmem, size = 0x800, scoped, tag = 'input window, operand 0, single buffered']
    #allocation4 [shape = 's32[1]{0}', space=sflag, size = 0x4, scoped, tag = 'scoped memory for tpu_custom_call.1']
    #allocation5 [shape = 's32[1]{0}', space=sflag, size = 0x4, scoped, tag = 'scoped memory for tpu_custom_call.1']
    #allocation6 [shape = 'u8[16384]{0}', space=vmem, size = 0x4000, scoped, tag = 'input window, operand 1, single buffered']
    #allocation7 [shape = 's32[1]{0}', space=sflag, size = 0x4, scoped, tag = 'scoped memory for tpu_custom_call.1']
    #allocation8 [shape = 'u8[512]{0}', space=vmem, size = 0x400, scoped, tag = 'input window, operand 2, single buffered']
    #allocation9 [shape = 'u8[2048]{0}', space=vmem, size = 0x800, scoped, tag = 'output window, operand 0, single buffered']
    %8 = vsyncpa [#allocation4], 0
    %9 = vsyncpa [#allocation7], 0
    %10 = vsyncpa [#allocation5], 0
    // Predicated region
    $region2: #{tpu_custom_call.1} parent=1 // pred_check
      _
    $region3: #{tpu_custom_call.1} parent=1 // pred_check_branch
      %12 = sbr.rel (0) target = $region5
    $region4: #{tpu_custom_call.1} parent=1 // pred_region
      %s14 = ssub.s32 64, 64
      %15 = vsyncadd [#allocation4], %s14
      %s17 = sshll.u32 [#allocation3], 4
      %s18 = int_to_ptr.vmem [resolvable:$true] %s17
      %20 = dma.hbm_to_vmem [thread:$0]  %s0, 64, %s18, [#allocation4]
    $region5: #{tpu_custom_call.1} parent=1 // pred_fallthru
      _
    // Predicated region
    $region6: #{tpu_custom_call.1} parent=1 // pred_check
      _
    $region7: #{tpu_custom_call.1} parent=1 // pred_check_branch
      %22 = sbr.rel (0) target = $region9
    $region8: #{tpu_custom_call.1} parent=1 // pred_region
      %s24 = ssub.s32 512, 512
      %25 = vsyncadd [#allocation7], %s24
      %s26 = sshll.u32 [#allocation6], 4
      %s27 = int_to_ptr.vmem [resolvable:$true] %s26
      %32 = dma.hbm_to_vmem [thread:$0]  %s1, 512, %s27, [#allocation7], 128, 128, 8
    $region9: #{tpu_custom_call.1} parent=1 // pred_fallthru
      _
    // Predicated region
    $region10: #{tpu_custom_call.1} parent=1 // pred_check
      _
    $region11: #{tpu_custom_call.1} parent=1 // pred_check_branch
      %34 = sbr.rel (0) target = $region13
    $region12: #{tpu_custom_call.1} parent=1 // pred_region
      %s36 = ssub.s32 16, 16
      %37 = vsyncadd [#allocation7], %s36
      %s39 = sshll.u32 [#allocation8], 4
      %s40 = int_to_ptr.vmem [resolvable:$true] %s39
      %42 = dma.hbm_to_vmem [thread:$0]  %s2, 16, %s40, [#allocation7]
    $region13: #{tpu_custom_call.1} parent=1 // pred_fallthru
      _
    // Predicated region
    $region14: #{tpu_custom_call.1} parent=1 // pred_check
      _
    $region15: #{tpu_custom_call.1} parent=1 // pred_check_branch
      %44 = sbr.rel (0) target = $region17
    $region16: #{tpu_custom_call.1} parent=1 // pred_region
      %45 = dma.done [#allocation4], 64
    $region17: #{tpu_custom_call.1} parent=1 // pred_fallthru
      _
    // Predicated region
    $region18: #{tpu_custom_call.1} parent=1 // pred_check
      _
    $region19: #{tpu_custom_call.1} parent=1 // pred_check_branch
      %47 = sbr.rel (0) target = $region21
    $region20: #{tpu_custom_call.1} parent=1 // pred_region
      %48 = dma.done [#allocation7], 512
    $region21: #{tpu_custom_call.1} parent=1 // pred_fallthru
      _
    // Predicated region
    $region22: #{tpu_custom_call.1} parent=1 // pred_check
      _
    $region23: #{tpu_custom_call.1} parent=1 // pred_check_branch
      %50 = sbr.rel (0) target = $region25
    $region24: #{tpu_custom_call.1} parent=1 // pred_region
      %51 = dma.done [#allocation7], 16
    $region25: #{tpu_custom_call.1} parent=1 // pred_fallthru
      _
    %p52 = scmp.eq.s32.totalorder 0, 0
    // Predicated region
    $region26: #{tpu_custom_call.1} parent=1 // pred_check
      %p53 = pneg %p52
    $region27: #{tpu_custom_call.1} parent=1 // pred_check_branch
      %55 = sbr.rel (%p53) target = $region29
    $region28: #{tpu_custom_call.1} parent=1 // pred_region
      %vm56 = vcmask 388096
      %57 = vst.msk [vmem:[#allocation2] sm:$0xf] %vm56, 0.0
    $region29: #{tpu_custom_call.1} parent=1 // pred_fallthru
      _
    %v58 = vld [vmem:[#allocation3] sm:$0xf]
    %v59 = vld [vmem:[#allocation2] sm:$0xf]
    %v60 = vld [vmem:[#allocation6] sm:$0xff]
    %v61 = vld [vmem:[#allocation6 + $0x8] sm:$0xff]
    %v62 = vld [vmem:[#allocation6 + $0x10] sm:$0xff]
    %v63 = vld [vmem:[#allocation6 + $0x18] sm:$0xff]
    %vm64 = vcmask 261120
    %v66 = vsel %vm64, %v58, 0
    %68 = vmatprep.subr.mxu0 0.0
    %69 = vmatpush1.msra.mxu0 %v60
    %70 = vmatprep.subr.mxu0 0.0
    %71 = vmatpush1.msra.mxu0 %v61
    %72 = vmatprep.subr.mxu0 0.0
    %73 = vmatpush1.msra.mxu0 %v62
    %74 = vmatprep.subr.mxu0 0.0
    %75 = vmatpush1.msra.mxu0 %v63
    %76 = vmatprep.subr.mxu0 0.0
    %77 = vmatpush1.msra.mxu0 0.0
    %78 = vmatprep.subr.mxu0 0.0
    %79 = vmatpush1.msra.mxu0 0.0
    %80 = vmatprep.subr.mxu0 0.0
    %81 = vmatpush1.msra.mxu0 0.0
    %82 = vmatprep.subr.mxu0 0.0
    %83 = vmatpush1.msra.mxu0 0.0
    %84 = vmatprep.subr.mxu0 0.0
    %85 = vmatpush1.msra.mxu0 0.0
    %86 = vmatprep.subr.mxu0 0.0
    %87 = vmatpush1.msra.mxu0 0.0
    %88 = vmatprep.subr.mxu0 0.0
    %89 = vmatpush1.msra.mxu0 0.0
    %90 = vmatprep.subr.mxu0 0.0
    %91 = vmatpush1.msra.mxu0 0.0
    %92 = vmatprep.subr.mxu0 0.0
    %93 = vmatpush1.msra.mxu0 0.0
    %94 = vmatprep.subr.mxu0 0.0
    %95 = vmatpush1.msra.mxu0 0.0
    %96 = vmatprep.subr.mxu0 0.0
    %97 = vmatpush1.msra.mxu0 0.0
    %98 = vmatprep.subr.mxu0 0.0
    %99 = vmatpush1.msra.mxu0 0.0
    %100 = vmatprep.subr.mxu0 0.0
    %101 = vmatpush1.msra.mxu0 0.0
    %102 = vmatprep.subr.mxu0 0.0
    %103 = vmatpush1.msra.mxu0 0.0
    %104 = vmatprep.subr.mxu0 0.0
    %105 = vmatpush1.msra.mxu0 0.0
    %106 = vmatprep.subr.mxu0 0.0
    %107 = vmatpush1.msra.mxu0 0.0
    %108 = vmatprep.subr.mxu0 0.0
    %109 = vmatpush1.msra.mxu0 0.0
    %110 = vmatprep.subr.mxu0 0.0
    %111 = vmatpush1.msra.mxu0 0.0
    %112 = vmatprep.subr.mxu0 0.0
    %113 = vmatpush1.msra.mxu0 0.0
    %114 = vmatprep.subr.mxu0 0.0
    %115 = vmatpush1.msra.mxu0 0.0
    %116 = vmatprep.subr.mxu0 0.0
    %117 = vmatpush1.msra.mxu0 0.0
    %118 = vmatprep.subr.mxu0 0.0
    %119 = vmatpush1.msra.mxu0 0.0
    %120 = vmatprep.subr.mxu0 0.0
    %121 = vmatpush1.msra.mxu0 0.0
    %122 = vmatprep.subr.mxu0 0.0
    %123 = vmatpush1.msra.mxu0 0.0
    %124 = vmatprep.subr.mxu0 0.0
    %125 = vmatpush1.msra.mxu0 0.0
    %126 = vmatprep.subr.mxu0 0.0
    %127 = vmatpush1.msra.mxu0 0.0
    %128 = vmatprep.subr.mxu0 0.0
    %129 = vmatpush1.msra.mxu0 0.0
    %130 = vmatprep.subr.mxu0 0.0
    %131 = vmatpush1.msra.mxu0 0.0
    %132 = vmatprep.mubr.f32.mxu0 0.0
    %133 = vmatmul.mubr.f32.gmra.mrb[0].mxu0 %v66
    %v134 = vpop.f32.mrb[0].mxu0
    %v135 = vadd.f32 0.0, %v134
    %v136 = vpop.f32.mrb[0].mxu0
    %137 = vdwg.mxu0
    %v138 = vadd.f32 %v59, %v135
    %vm139 = vcmask 388096
    %140 = vst.msk [vmem:[#allocation2] sm:$0xf] %vm139, %v138
    // Predicated region
    $region30: #{tpu_custom_call.1} parent=1 // pred_check
      %p141 = pneg %p52
    $region31: #{tpu_custom_call.1} parent=1 // pred_check_branch
      %143 = sbr.rel (%p141) target = $region33
    $region32: #{tpu_custom_call.1} parent=1 // pred_region
      %v144 = vld [vmem:[#allocation2] sm:$0xf]
      %v145 = vld [vmem:[#allocation8] sm:$0x1]
      %v147 = vlaneseq
      %v148 = vshrl.u32 %v147, 7
      %v149 = vsub.s32 0, %v148
      %v150 = vrot.slane %v145, %v149
      %v152 = vadd.f32 %v144, %v150
      %153 = vst.msk [vmem:[#allocation9] sm:$0xf] %vm139, %v152
    $region33: #{tpu_custom_call.1} parent=1 // pred_fallthru
      _
    // Predicated region
    $region34: #{tpu_custom_call.1} parent=1 // pred_check
      _
    $region35: #{tpu_custom_call.1} parent=1 // pred_check_branch
      %155 = sbr.rel (0) target = $region37
    $region36: #{tpu_custom_call.1} parent=1 // pred_region
      %s157 = ssub.s32 64, 64
      %158 = vsyncadd [#allocation5], %s157
      %s160 = sshll.u32 [#allocation9], 4
      %s161 = int_to_ptr.vmem [resolvable:$true] %s160
      %163 = dma.vmem_to_hbm [thread:$0]  %s161, 64, %s3, [#allocation5]
    $region37: #{tpu_custom_call.1} parent=1 // pred_fallthru
      _
    // Predicated region
    $region38: #{tpu_custom_call.1} parent=1 // pred_check
      _
    $region39: #{tpu_custom_call.1} parent=1 // pred_check_branch
      %165 = sbr.rel (0) target = $region41
    $region40: #{tpu_custom_call.1} parent=1 // pred_region
      %166 = dma.done [#allocation5], 64
    $region41: #{tpu_custom_call.1} parent=1 // pred_fallthru
      _
    %167 = vsyncpa [#allocation4], 1
    %168 = vsyncpa [#allocation7], 1
    %169 = vsyncpa [#allocation5], 1

</llo_original>
